<compile_context>
chip_gen: v7x
topology: tpu7x:2x2x1
jax: 0.10.0
libtpu: 0.0.40
codegen_flags: <defaults>
</compile_context>

<pallas_src>
import numpy as np
import jax
import jax.numpy as jnp
from jax.experimental import pallas as pl
from jax.experimental.pallas import tpu as pltpu


def make_positional_encoding_table(d_model: int, max_len: int = 5000,
                                   dtype=jnp.float32) -> jnp.ndarray:
    """Deterministic buffer setup matching the PyTorch __init__ (even d_model)."""
    position = np.arange(max_len, dtype=np.float64)[:, None]                 # (max_len, 1)
    div_term = np.exp(np.arange(0, d_model, 2, dtype=np.float64)
                      * (-np.log(10000.0) / d_model))                        # (ceil(d/2),)
    angles = position * div_term                                             # (max_len, ceil(d/2))
    pe = np.zeros((max_len, d_model), dtype=np.float64)
    pe[:, 0::2] = np.sin(angles)
    pe[:, 1::2] = np.cos(angles[:, : d_model // 2])
    return jnp.asarray(pe, dtype=dtype)                                      # (max_len, d_model)


# ----------------------------- kernels ---------------------------------------


def _pe_add_kernel_2d(x_ref, pe_ref, o_ref):
    # x_ref / o_ref: (TS, D) row-tile of the flattened (B*S, D) activation.
    # pe_ref:        (TS, D) matching window of the positional-encoding table.
    o_ref[...] = x_ref[...] + pe_ref[...]


def _pe_add_kernel_3d(x_ref, pe_ref, o_ref):
    # Fallback path: x_ref (1, S, D) per-batch block, pe_ref (S, D) shared slice.
    o_ref[...] = x_ref[...] + pe_ref[...][None, :, :]


# ----------------------------- tiling helpers --------------------------------


def _vmem_limit_and_budget():
    """Scoped-VMEM limit to request and the byte budget for pipeline tiles."""
    try:
        info = pltpu.get_tpu_info()
        phys = int(getattr(info, "vmem_capacity_bytes", 0)) or 64 * 1024 * 1024
    except Exception:  # interpret mode / older runtimes
        phys = 64 * 1024 * 1024  # conservative: v7x per-TC physical VMEM
    limit = int(min(phys // 2, 64 * 1024 * 1024))   # v5e/v6e -> 64 MiB, v7x -> 32 MiB
    budget = int(limit * 3 // 4)                    # headroom for compiler scratch
    return limit, budget


def _pick_tile_rows(S, D, itemsize, budget_bytes):
    """Largest TS that divides S, is a multiple of 8, and keeps
    2*x + 2*out + 1*pe (~5 tiles of TS*D) within budget. None if S has no
    multiple-of-8 divisor."""
    if S % 8 != 0:
        return None
    max_rows = max(8, budget_bytes // (5 * D * itemsize))
    ts = 8
    for cand in range(8, S + 1, 8):
        if S % cand == 0 and cand <= max_rows:
            ts = cand
    return ts


# ----------------------------- wrapper ----------------------------------------


def positional_encoding_forward(x: jnp.ndarray, pe_table: jnp.ndarray) -> jnp.ndarray:
    """x: (B, S, D); pe_table: (max_len, D). Returns x + pe[:S] broadcast over batch."""
    B, S, D = x.shape
    max_len = pe_table.shape[0]
    if S > max_len:
        raise ValueError(f"sequence length {S} exceeds max_len {max_len}")

    pe_table = pe_table.astype(x.dtype)           # add happens in the activation dtype
    vmem_limit, tile_budget = _vmem_limit_and_budget()
    itemsize = jnp.dtype(x.dtype).itemsize
    ts = _pick_tile_rows(S, D, itemsize, tile_budget)

    compiler_params = pltpu.CompilerParams(
        dimension_semantics=("parallel",),
        vmem_limit_bytes=vmem_limit,
    )

    if ts is not None:
        # -------- primary path: flattened (B*S, D), row-tiled ------------------
        x2 = x.reshape(B * S, D)
        n_blocks = (B * S) // ts
        pe_blocks_per_seq = S // ts
        if pe_blocks_per_seq == 1:
            pe_index_map = lambda i: (0, 0)                       # pe tile stays resident
        else:
            pe_index_map = lambda i: (i % pe_blocks_per_seq, 0)   # walk pe rows, wrap per batch

        out2 = pl.pallas_call(
            _pe_add_kernel_2d,
            out_shape=jax.ShapeDtypeStruct((B * S, D), x.dtype),
            grid_spec=pltpu.PrefetchScalarGridSpec(
                num_scalar_prefetch=0,
                grid=(n_blocks,),
                in_specs=[
                    pl.BlockSpec((ts, D), lambda i: (i, 0)),      # x row-tile
                    pl.BlockSpec((ts, D), pe_index_map),          # pe window (no host slice)
                ],
                out_specs=pl.BlockSpec((ts, D), lambda i: (i, 0)),
            ),
            compiler_params=compiler_params,
            input_output_aliases={0: 0},                          # out reuses x's buffer
        )(x2, pe_table)
        return out2.reshape(B, S, D)

    # -------- fallback path (S not a multiple of 8): per-batch blocks ----------
    pe_slice = pe_table[:S, :]                                    # static slice, (S, D)
    return pl.pallas_call(
        _pe_add_kernel_3d,
        out_shape=jax.ShapeDtypeStruct((B, S, D), x.dtype),
        grid_spec=pltpu.PrefetchScalarGridSpec(
            num_scalar_prefetch=0,
            grid=(B,),
            in_specs=[
                pl.BlockSpec((1, S, D), lambda b: (b, 0, 0)),
                pl.BlockSpec((S, D), lambda b: (0, 0)),           # resident pe slice
            ],
            out_specs=pl.BlockSpec((1, S, D), lambda b: (b, 0, 0)),
        ),
        compiler_params=compiler_params,
        input_output_aliases={0: 0},
    )(x, pe_slice)


# ----------------------------- test ------------------------------------------


if __name__ == "__main__":
    B, S, D = 2, 8, 32
    max_len = 64  # small synthetic max_len (module default is 5000)

    key = jax.random.PRNGKey(0)
    x = jax.random.normal(key, (B, S, D), dtype=jnp.float32)
    pe_table = make_positional_encoding_table(D, max_len)

    # Compute the reference BEFORE running the kernel (output aliases x's buffer).
    ref = np.asarray(x) + np.asarray(pe_table)[None, :S, :]

    out = positional_encoding_forward(x, pe_table)
    out = jax.block_until_ready(out)

    np.testing.assert_allclose(np.asarray(out), ref, rtol=1e-6, atol=1e-6)
    print("KERNEL_OK")
</pallas_src>

<mosaic_0001>
module attributes {stable_mosaic.version = 11 : i64} {
  func.func @_pe_add_kernel_2d(%arg0: i32, %arg1: memref<8x32xf32, #tpu.memory_space<vmem>>, %arg2: memref<8x32xf32, #tpu.memory_space<vmem>>, %arg3: memref<8x32xf32, #tpu.memory_space<vmem>>) attributes {dimension_semantics = [#tpu.dimension_semantics<parallel>], iteration_bounds = array<i64: 2>, scalar_prefetch = 0 : i64, scratch_operands = 0 : i64, tpu.core_type = #tpu.core_type<tc>, window_params = [{transform_indices = @transform_0, window_bounds = array<i64: 8, 32>}, {transform_indices = @transform_1, window_bounds = array<i64: 8, 32>}, {transform_indices = @transform_2, window_bounds = array<i64: 8, 32>}]} {
    %c0 = arith.constant 0 : index
    %c0_0 = arith.constant 0 : index
    %0 = vector.load %arg1[%c0, %c0_0] : memref<8x32xf32, #tpu.memory_space<vmem>>, vector<8x32xf32>
    %c0_1 = arith.constant 0 : index
    %c0_2 = arith.constant 0 : index
    %1 = vector.load %arg2[%c0_1, %c0_2] : memref<8x32xf32, #tpu.memory_space<vmem>>, vector<8x32xf32>
    %2 = arith.addf %0, %1 : vector<8x32xf32>
    %c0_3 = arith.constant 0 : index
    %c0_4 = arith.constant 0 : index
    %3 = vector.load %arg3[%c0_3, %c0_4] : memref<8x32xf32, #tpu.memory_space<vmem>>, vector<8x32xf32>
    tpu.vector_store %arg3[%c0_3, %c0_4], %2 {strides = array<i32>} : memref<8x32xf32, #tpu.memory_space<vmem>>, vector<8x32xf32>,
    return
  }
  func.func @transform_0(%arg0: i32) -> (i32, i32) {
    %c0_i32 = arith.constant 0 : i32
    %c0_i32_0 = arith.constant 0 : i32
    return %arg0, %c0_i32 : i32, i32
  }
  func.func @transform_1(%arg0: i32) -> (i32, i32) {
    %c0_i32 = arith.constant 0 : i32
    %c0_i32_0 = arith.constant 0 : i32
    %c0_i32_1 = arith.constant 0 : i32
    return %c0_i32, %c0_i32_0 : i32, i32
  }
  func.func @transform_2(%arg0: i32) -> (i32, i32) {
    %c0_i32 = arith.constant 0 : i32
    %c0_i32_0 = arith.constant 0 : i32
    return %arg0, %c0_i32 : i32, i32
  }
}

</mosaic_0001>

<llo_original>
// kernel: tpu_custom_call.1
$region0: #{tpu_custom_call.1}
  #allocation0 [shape = 'u32[]', space=smem, size = 0x4, offset = 0x4, fixed_abs, tag = 'smem constant byte address 0x4 - core index']
  #allocation1 [shape = 'u32[144,128]{1,0:T(1,128)}', space=vmem, size = 0x12000, scoped, tag = 'internal scratch']
  %s0 = inlined_call_operand.hbm [shape: f32[16,32], index: 0, kind: input, shape index: {}, may-alias: {0,2}]
  %s1 = inlined_call_operand.vmem [shape: f32[64,32], index: 1, kind: input, shape index: {}]
  %s2 = inlined_call_operand.hbm [shape: f32[16,32], index: 2, kind: output, shape index: {}, may-alias: {0,2}]
  %s3 = sld [smem:[#allocation0]]
  $region45: #{tpu_custom_call.1} parent=0
    _
  %s5 = ssub.s32 1, %s3
  %s6 = scalar_select 0, %s5, %s3
  $region1: #{tpu_custom_call.1} parent=0
    #allocation2 [shape = 'u8[8192]{0}', space=vmem, size = 0x2000, scoped, tag = 'input window, operand 0']
    #allocation3 [shape = 's32[2]{0}', space=sflag, size = 0x8, scoped, tag = 'scoped memory for tpu_custom_call.1']
    #allocation4 [shape = 's32[2]{0}', space=sflag, size = 0x8, scoped, tag = 'scoped memory for tpu_custom_call.1']
    #allocation5 [shape = 'u8[8192]{0}', space=vmem, size = 0x2000, scoped, tag = 'output window, operand 0']
    %7 = vsyncpa [#allocation3], 0
    %s8 = scalar_lea.sflag [#allocation3], 1
    %9 = vsyncpa %s8, 0
    %10 = vsyncpa [#allocation4], 0
    %s11 = scalar_lea.sflag [#allocation4], 1
    %12 = vsyncpa %s11, 0
    loop: start=0, step=1, limit=4
    $region2: #{tpu_custom_call.1} parent=1 // loop_pre_header
      _
    $region3: #{tpu_custom_call.1} parent=1 // loop_header
      %s14 = sphi 0, %s18
      %p15 = scmp.ge.s32.totalorder %s14, 4
      %s24 = sphi 0, %s26
      %s27 = sphi 0, %s24
      %s28 = sphi 0, %s27
      %s44 = sphi 0, %s28
      %s48 = sphi 0, %s48
      %s50 = sphi 0, %s48
      %s51 = sphi 0, %s50
      %s65 = sphi 0, %s51
      %s71 = sphi 0, %s73
      %s74 = sphi 0, %s71
      %s75 = sphi 0, %s74
      %s91 = sphi 0, %s75
    $region4: #{tpu_custom_call.1} parent=1 // loop_header_branch
      %17 = sbr.rel (%p15) target = $region8
    $region5: #{tpu_custom_call.1} parent=1 // loop_body
      %s19 = ssub.s32 %s14, 1
      %s20 = ssub.s32 %s14, 2
      %s21 = sadd.s32 %s14, 1
      %s22 = ssub.s32 %s14, %s21
      %p23 = scmp.eq.s32.totalorder %s22, 0
      %s25 = sadd.s32 %s24, 1
      %s26 = scalar_select %p23, %s24, %s25
      %p29 = pneg %p23
      %p30 = scmp.eq.s32.totalorder %s14, 1
      %p31 = por %p29, %p30
      %p32 = scmp.ne.s32.totalorder %s24, %s27
      %p33 = scmp.eq.s32.totalorder %s14, 0
      %p34 = por %p32, %p33
      %p35 = scmp.ne.s32.totalorder %s24, %s27
      %p36 = scmp.eq.s32.totalorder %s19, 1
      %p37 = por %p35, %p36
      %p38 = scmp.ne.s32.totalorder %s27, %s28
      %p39 = scmp.eq.s32.totalorder %s19, 0
      %p40 = por %p38, %p39
      %p41 = scmp.ne.s32.totalorder %s27, %s28
      %p42 = scmp.eq.s32.totalorder %s20, 1
      %p43 = por %p41, %p42
      %p45 = scmp.ne.s32.totalorder %s28, %s44
      %p46 = scmp.eq.s32.totalorder %s20, 0
      %p47 = por %p45, %p46
      %s49 = sadd.s32 %s48, 1
      %p52 = scmp.eq.s32.totalorder %s14, 1
      %p53 = scmp.ne.s32.totalorder %s48, %s50
      %p54 = scmp.eq.s32.totalorder %s14, 0
      %p55 = por %p53, %p54
      %p56 = scmp.ne.s32.totalorder %s48, %s50
      %p57 = scmp.eq.s32.totalorder %s19, 1
      %p58 = por %p56, %p57
      %p59 = scmp.ne.s32.totalorder %s50, %s51
      %p60 = scmp.eq.s32.totalorder %s19, 0
      %p61 = por %p59, %p60
      %p62 = scmp.ne.s32.totalorder %s50, %s51
      %p63 = scmp.eq.s32.totalorder %s20, 1
      %p64 = por %p62, %p63
      %p66 = scmp.ne.s32.totalorder %s51, %s65
      %p67 = scmp.eq.s32.totalorder %s20, 0
      %p68 = por %p66, %p67
      %s69 = ssub.s32 %s14, %s21
      %p70 = scmp.eq.s32.totalorder %s69, 0
      %s72 = sadd.s32 %s71, 1
      %s73 = scalar_select %p70, %s71, %s72
      %p76 = pneg %p70
      %p77 = scmp.eq.s32.totalorder %s14, 1
      %p78 = por %p76, %p77
      %p79 = scmp.ne.s32.totalorder %s71, %s74
      %p80 = scmp.eq.s32.totalorder %s14, 0
      %p81 = por %p79, %p80
      %p82 = scmp.ne.s32.totalorder %s71, %s74
      %p83 = scmp.eq.s32.totalorder %s19, 1
      %p84 = por %p82, %p83
      %p85 = scmp.ne.s32.totalorder %s74, %s75
      %p86 = scmp.eq.s32.totalorder %s19, 0
      %p87 = por %p85, %p86
      %p88 = scmp.ne.s32.totalorder %s74, %s75
      %p89 = scmp.eq.s32.totalorder %s20, 1
      %p90 = por %p88, %p89
      %p92 = scmp.ne.s32.totalorder %s75, %s91
      %p93 = scmp.eq.s32.totalorder %s20, 0
      %p94 = por %p92, %p93
      %p95 = scmp.le.s32.totalorder 1, %s14
      %p96 = scmp.lt.s32.totalorder %s14, 3
      %p97 = pnand %p95, %p96
      %p98 = pneg %p97
      // Predicated region
      $region9: #{tpu_custom_call.1} parent=5 // pred_check
        _
      $region10: #{tpu_custom_call.1} parent=5 // pred_check_branch
        %100 = sbr.rel (%p97) target = $region12
      $region11: #{tpu_custom_call.1} parent=5 // pred_region
        %s101 = ssub.s32 %s14, 1
        // Predicated region
        $region13: #{tpu_custom_call.1} parent=11 // pred_check
          %p102 = pneg %p61
        $region14: #{tpu_custom_call.1} parent=11 // pred_check_branch
          %104 = sbr.rel (%p102) target = $region16
        $region15: #{tpu_custom_call.1} parent=11 // pred_region
          _
        $region16: #{tpu_custom_call.1} parent=11 // pred_fallthru
          _
      $region12: #{tpu_custom_call.1} parent=5 // pred_fallthru
        _
      %p105 = scmp.lt.s32.totalorder %s14, 2
      // Predicated region
      $region17: #{tpu_custom_call.1} parent=5 // pred_check
        %p106 = pneg %p105
      $region18: #{tpu_custom_call.1} parent=5 // pred_check_branch
        %108 = sbr.rel (%p106) target = $region20
      $region19: #{tpu_custom_call.1} parent=5 // pred_region
        // Predicated region
        $region21: #{tpu_custom_call.1} parent=19 // pred_check
          %p109 = pneg %p34
        $region22: #{tpu_custom_call.1} parent=19 // pred_check_branch
          %111 = sbr.rel (%p109) target = $region24
        $region23: #{tpu_custom_call.1} parent=19 // pred_region
          %s112 = sand.u32 %s24, 1
          %s113 = scalar_lea.sflag [#allocation3], %s112
          %s114 = sand.u32 %s24, 1
          %s115 = smul.addr %s114, 8
          %s116 = scalar_lea.vmem [#allocation2], %s115
          %s118 = ssub.s32 128, 128
          %119 = vsyncadd %s113, %s118
          %s120 = smul.addr %s14, 128
          %s121 = scalar_lea.hbm %s0, %s120
          %s123 = sshll.u32 %s116, 4
          %s124 = int_to_ptr.vmem [resolvable:$true] %s123
          %126 = dma.hbm_to_vmem [thread:$0]  %s121, 128, %s124, %s113
        $region24: #{tpu_custom_call.1} parent=19 // pred_fallthru
          _
      $region20: #{tpu_custom_call.1} parent=5 // pred_fallthru
        _
      %p127 = scmp.le.s32.totalorder 1, %s14
      %p128 = scmp.lt.s32.totalorder %s14, 3
      %p129 = pnand %p127, %p128
      %p130 = pneg %p129
      // Predicated region
      $region25: #{tpu_custom_call.1} parent=5 // pred_check
        _
      $region26: #{tpu_custom_call.1} parent=5 // pred_check_branch
        %132 = sbr.rel (%p129) target = $region28
      $region27: #{tpu_custom_call.1} parent=5 // pred_region
        %s133 = ssub.s32 %s14, 1
        %s134 = sand.u32 %s27, 1
        %s135 = scalar_lea.sflag [#allocation3], %s134
        %s136 = sand.u32 %s27, 1
        %s137 = smul.addr %s136, 8
        %s138 = scalar_lea.vmem [#allocation2], %s137
        // Predicated region
        $region29: #{tpu_custom_call.1} parent=27 // pred_check
          %p139 = pneg %p40
        $region30: #{tpu_custom_call.1} parent=27 // pred_check_branch
          %141 = sbr.rel (%p139) target = $region32
        $region31: #{tpu_custom_call.1} parent=27 // pred_region
          %142 = dma.done %s135, 128
        $region32: #{tpu_custom_call.1} parent=27 // pred_fallthru
          _
        %s143 = sand.u32 %s27, 1
        %s144 = scalar_lea.sflag [#allocation3], %s143
        %s145 = sand.u32 %s27, 1
        %s146 = smul.addr %s145, 8
        %s147 = scalar_lea.vmem [#allocation2], %s146
        %p148 = pneg %p40
        %p149 = pneg %p37
        %p150 = pneg %p61
        %p151 = pneg %p58
        %p152 = pneg %p87
        %p153 = pneg %p84
        %s154 = sand.u32 %s74, 1
        %s155 = scalar_lea.sflag [#allocation4], %s154
        %s156 = sand.u32 %s74, 1
        %s157 = smul.addr %s156, 8
        %s158 = scalar_lea.vmem [#allocation5], %s157
        %v159 = vld [vmem:[%s138] sm:$0xff]
        %v160 = vld [vmem:[%s1] sm:$0xff]
        %v161 = vadd.f32 %v159, %v160
        %vm162 = vcmask 261120
        %163 = vst.msk [vmem:[%s158] sm:$0xff] %vm162, %v161
        %s164 = sand.u32 %s74, 1
        %s165 = scalar_lea.sflag [#allocation4], %s164
        %s166 = sand.u32 %s74, 1
        %s167 = smul.addr %s166, 8
        %s168 = scalar_lea.vmem [#allocation5], %s167
        // Predicated region
        $region33: #{tpu_custom_call.1} parent=27 // pred_check
          %p169 = pneg %p84
        $region34: #{tpu_custom_call.1} parent=27 // pred_check_branch
          %171 = sbr.rel (%p169) target = $region36
        $region35: #{tpu_custom_call.1} parent=27 // pred_region
          %s173 = ssub.s32 128, 128
          %174 = vsyncadd %s165, %s173
          %s175 = smul.addr %s19, 128
          %s176 = scalar_lea.hbm %s2, %s175
          %s178 = sshll.u32 %s168, 4
          %s179 = int_to_ptr.vmem [resolvable:$true] %s178
          %181 = dma.vmem_to_hbm [thread:$0]  %s179, 128, %s176, %s165
        $region36: #{tpu_custom_call.1} parent=27 // pred_fallthru
          _
      $region28: #{tpu_custom_call.1} parent=5 // pred_fallthru
        _
      %p182 = scmp.le.s32.totalorder 2, %s14
      // Predicated region
      $region37: #{tpu_custom_call.1} parent=5 // pred_check
        %p183 = pneg %p182
      $region38: #{tpu_custom_call.1} parent=5 // pred_check_branch
        %185 = sbr.rel (%p183) target = $region40
      $region39: #{tpu_custom_call.1} parent=5 // pred_region
        %s186 = ssub.s32 %s14, 2
        // Predicated region
        $region41: #{tpu_custom_call.1} parent=39 // pred_check
          %p187 = pneg %p90
        $region42: #{tpu_custom_call.1} parent=39 // pred_check_branch
          %189 = sbr.rel (%p187) target = $region44
        $region43: #{tpu_custom_call.1} parent=39 // pred_region
          %s190 = sand.u32 %s75, 1
          %s191 = scalar_lea.sflag [#allocation4], %s190
          %s192 = sand.u32 %s75, 1
          %s193 = smul.addr %s192, 8
          %s194 = scalar_lea.vmem [#allocation5], %s193
          %195 = dma.done %s191, 128
        $region44: #{tpu_custom_call.1} parent=39 // pred_fallthru
          _
      $region40: #{tpu_custom_call.1} parent=5 // pred_fallthru
        _
    $region6: #{tpu_custom_call.1} parent=1 // loop_footer
      %s18 = sadd.s32 1, %s14
    $region7: #{tpu_custom_call.1} parent=1 // loop_footer_branch
      %13 = sbr.rel target = $region3
    $region8: #{tpu_custom_call.1} parent=1 // loop_exit
      _
    %196 = vsyncpa [#allocation3], 1
    %s197 = scalar_lea.sflag [#allocation3], 1
    %198 = vsyncpa %s197, 1
    %199 = vsyncpa [#allocation4], 1
    %s200 = scalar_lea.sflag [#allocation4], 1
    %201 = vsyncpa %s200, 1

</llo_original>
